<compile_context>
chip_gen: v7x
topology: tpu7x:2x2x1
jax: 0.10.0
libtpu: 0.0.40
codegen_flags: <defaults>
</compile_context>

<pallas_src>
import jax
import jax.numpy as jnp
from jax.experimental import pallas as pl
from jax.experimental.pallas import tpu as pltpu

_PACK = 64   # x rows packed per lane-dense row: 64*32=2048 in-lanes, 64*2=128 out-lanes
_IN = 32
_OUT = 2


def _fused_kernel(xp_ref, w_ref, b_ref, o_ref):
    # [TB, 2048] @ [2048, 128] + [1, 128] -> [TB, 128]; single MXU push per grid step.
    acc = jnp.dot(xp_ref[...], w_ref[...], preferred_element_type=jnp.float32)
    o_ref[...] = (acc + b_ref[...]).astype(o_ref.dtype)


def _fuse_params(w1, b1, wc, bc):
    """Fold linear1 and classify into one weight/bias, then block-diagonalize."""
    wf = jnp.dot(w1, wc, preferred_element_type=jnp.float32)        # [32, 2]
    bf = jnp.dot(b1, wc, preferred_element_type=jnp.float32) + bc   # [1, 2]
    wbd = jnp.kron(jnp.eye(_PACK, dtype=jnp.float32), wf)           # [2048, 128]
    bbd = jnp.tile(bf, (1, _PACK))                                  # [1, 128]
    return wbd, bbd


def clinicmodel_forward(x, w1, b1, wc, bc, *, block_rows=512, use_pallas=None):
    """x: [B, 32] float32 -> [B, 2] float32."""
    B, F = x.shape
    assert F == _IN
    if use_pallas is None:
        use_pallas = B >= 4096  # kernel-launch overhead dominates tiny batches
    if not use_pallas:
        return (x @ w1 + b1) @ wc + bc   # identical math, plain JAX

    wbd, bbd = _fuse_params(w1, b1, wc, bc)

    P = _PACK
    r_needed = pl.cdiv(B, P)                 # packed rows required
    if r_needed >= block_rows:
        tb = block_rows                      # multiple of 8 -> legal block dim
    else:
        tb = r_needed                        # block == full (padded) dim -> legal
    r = pl.cdiv(r_needed, tb) * tb           # packed rows after padding
    bp = r * P                               # padded batch size

    xp = x
    if bp != B:
        xp = jnp.pad(x, ((0, bp - B), (0, 0)))   # zero-pad tail rows
    xp = xp.reshape(r, P * F)                    # free row-major reshape

    # Advisory cost of the custom call (actual kernel work / traffic).
    cost = pl.CostEstimate(
        flops=2 * r * (P * F) * (P * _OUT),
        transcendentals=0,
        bytes_accessed=4 * (r * P * F + P * F * P * _OUT + r * P * _OUT),
    )

    out_p = pl.pallas_call(
        _fused_kernel,
        out_shape=jax.ShapeDtypeStruct((r, P * _OUT), jnp.float32),
        grid=(r // tb,),
        in_specs=[
            pl.BlockSpec((tb, P * F), lambda i: (i, 0)),           # x tile (pipelined)
            pl.BlockSpec((P * F, P * _OUT), lambda i: (0, 0)),     # fused weight (resident)
            pl.BlockSpec((1, P * _OUT), lambda i: (0, 0)),         # fused bias (resident)
        ],
        out_specs=pl.BlockSpec((tb, P * _OUT), lambda i: (i, 0)),
        compiler_params=pltpu.CompilerParams(
            dimension_semantics=("parallel",)),                    # megacore on v7x
        cost_estimate=cost,
    )(xp, wbd, bbd)

    return out_p.reshape(bp, _OUT)[:B]


def xavier_uniform(key, fan_in, fan_out):
    bound = (6.0 / (fan_in + fan_out)) ** 0.5
    # PyTorch nn.Linear weight is [out, in]; we store the transpose [in, out].
    return jax.random.uniform(
        key, (fan_in, fan_out), jnp.float32, minval=-bound, maxval=bound
    )


def make_params(key):
    k1, k2 = jax.random.split(key, 2)
    w1 = xavier_uniform(k1, _IN, 16)        # linear1: 32 -> 16
    b1 = jnp.zeros((1, 16), jnp.float32)    # biases zero-init (deterministic)
    wc = xavier_uniform(k2, 16, _OUT)       # classify: 16 -> 2
    bc = jnp.zeros((1, _OUT), jnp.float32)
    # TODO(synk): linear2 (16 -> 8) exists in __init__ but is unused in forward.
    return w1, b1, wc, bc


def _reference(x, w1, b1, wc, bc):
    return (x @ w1 + b1) @ wc + bc


if __name__ == "__main__":
    key = jax.random.PRNGKey(0)
    kx1, kx2, kp = jax.random.split(key, 3)
    w1, b1, wc, bc = make_params(kp)

    # Test 1: non-multiple-of-64 batch (exercises padding + single-tile path),
    # forcing the Pallas path despite the small batch.
    b_small = 300
    x1 = jax.random.normal(kx1, (b_small, _IN), jnp.float32)
    out1 = clinicmodel_forward(x1, w1, b1, wc, bc, use_pallas=True)
    jax.block_until_ready(out1)
    ref1 = _reference(x1, w1, b1, wc, bc)
    assert out1.shape == (b_small, _OUT)
    assert jnp.allclose(out1, ref1, atol=2e-5, rtol=2e-5)

    # Test 2: multi-tile grid path with a small block size (exercises the
    # pipelined batch grid cheaply).
    b_med = 2048
    x2 = jax.random.normal(kx2, (b_med, _IN), jnp.float32)
    out2 = clinicmodel_forward(x2, w1, b1, wc, bc, block_rows=8, use_pallas=True)
    jax.block_until_ready(out2)
    ref2 = _reference(x2, w1, b1, wc, bc)
    assert out2.shape == (b_med, _OUT)
    assert jnp.allclose(out2, ref2, atol=2e-5, rtol=2e-5)

    print("KERNEL_OK")
</pallas_src>

<mosaic_0001>
module attributes {stable_mosaic.version = 11 : i64} {
  func.func @_fused_kernel(%arg0: i32, %arg1: memref<5x2048xf32, #tpu.memory_space<vmem>>, %arg2: memref<2048x128xf32, #tpu.memory_space<vmem>>, %arg3: memref<1x128xf32, #tpu.memory_space<vmem>>, %arg4: memref<5x128xf32, #tpu.memory_space<vmem>>) attributes {dimension_semantics = [#tpu.dimension_semantics<parallel>], iteration_bounds = array<i64: 1>, scalar_prefetch = 0 : i64, scratch_operands = 0 : i64, tpu.core_type = #tpu.core_type<tc>, window_params = [{transform_indices = @transform_0, window_bounds = array<i64: 5, 2048>}, {pipeline_mode = #tpu.pipeline_mode<synchronous>, transform_indices = @transform_1, window_bounds = array<i64: 2048, 128>}, {pipeline_mode = #tpu.pipeline_mode<synchronous>, transform_indices = @transform_2, window_bounds = array<i64: 1, 128>}, {transform_indices = @transform_3, window_bounds = array<i64: 5, 128>}]} {
    %c0 = arith.constant 0 : index
    %c0_0 = arith.constant 0 : index
    %0 = vector.load %arg1[%c0, %c0_0] : memref<5x2048xf32, #tpu.memory_space<vmem>>, vector<5x2048xf32>
    %c0_1 = arith.constant 0 : index
    %c0_2 = arith.constant 0 : index
    %1 = vector.load %arg2[%c0_1, %c0_2] : memref<2048x128xf32, #tpu.memory_space<vmem>>, vector<2048x128xf32>
    %cst = arith.constant dense<0.000000e+00> : vector<5x128xf32>
    %2 = tpu.matmul %0, %1, %cst {dimension_numbers = #tpu.dot_dimension_numbers<[1], [0], [0], [1], [0, 0, 1, 1], [], []>} : vector<5x2048xf32>, vector<2048x128xf32>, vector<5x128xf32> -> vector<5x128xf32>
    %c0_3 = arith.constant 0 : index
    %c0_4 = arith.constant 0 : index
    %3 = vector.load %arg3[%c0_3, %c0_4] : memref<1x128xf32, #tpu.memory_space<vmem>>, vector<1x128xf32>
    %4 = vector.broadcast %3 : vector<1x128xf32> to vector<5x128xf32>
    %5 = arith.addf %2, %4 : vector<5x128xf32>
    %c0_5 = arith.constant 0 : index
    %c0_6 = arith.constant 0 : index
    %6 = vector.load %arg4[%c0_5, %c0_6] : memref<5x128xf32, #tpu.memory_space<vmem>>, vector<5x128xf32>
    tpu.vector_store %arg4[%c0_5, %c0_6], %5 {strides = array<i32>} : memref<5x128xf32, #tpu.memory_space<vmem>>, vector<5x128xf32>,
    return
  }
  func.func @transform_0(%arg0: i32) -> (i32, i32) {
    %c0_i32 = arith.constant 0 : i32
    %c0_i32_0 = arith.constant 0 : i32
    return %arg0, %c0_i32 : i32, i32
  }
  func.func @transform_1(%arg0: i32) -> (i32, i32) {
    %c0_i32 = arith.constant 0 : i32
    %c0_i32_0 = arith.constant 0 : i32
    %c0_i32_1 = arith.constant 0 : i32
    return %c0_i32, %c0_i32_0 : i32, i32
  }
  func.func @transform_2(%arg0: i32) -> (i32, i32) {
    %c0_i32 = arith.constant 0 : i32
    %c0_i32_0 = arith.constant 0 : i32
    %c0_i32_1 = arith.constant 0 : i32
    return %c0_i32, %c0_i32_0 : i32, i32
  }
  func.func @transform_3(%arg0: i32) -> (i32, i32) {
    %c0_i32 = arith.constant 0 : i32
    %c0_i32_0 = arith.constant 0 : i32
    return %arg0, %c0_i32 : i32, i32
  }
}

</mosaic_0001>

<llo_original>
// kernel: tpu_custom_call.1
$region0: #{tpu_custom_call.1}
  #allocation0 [shape = 'u32[]', space=smem, size = 0x4, offset = 0x4, fixed_abs, tag = 'smem constant byte address 0x4 - core index']
  #allocation1 [shape = 'u32[144,128]{1,0:T(1,128)}', space=vmem, size = 0x12000, scoped, tag = 'internal scratch']
  %s0 = inlined_call_operand.hbm [shape: f32[5,2048], index: 0, kind: input, shape index: {}]
  %s1 = inlined_call_operand.hbm [shape: f32[2048,128], index: 1, kind: input, shape index: {}]
  %s2 = inlined_call_operand.vmem [shape: f32[1,128], index: 2, kind: input, shape index: {}]
  %s3 = inlined_call_operand.hbm [shape: f32[5,128], index: 3, kind: output, shape index: {}]
  %s4 = sld [smem:[#allocation0]]
  $region30: #{tpu_custom_call.1} parent=0
    _
  %s6 = ssub.s32 1, %s4
  %s7 = scalar_select 0, %s6, %s4
  $region1: #{tpu_custom_call.1} parent=0
    #allocation2 [shape = 'u8[65536]{0}', space=vmem, size = 0x10000, scoped, tag = 'input window, operand 0, single buffered']
    #allocation3 [shape = 's32[1]{0}', space=sflag, size = 0x4, scoped, tag = 'scoped memory for tpu_custom_call.1']
    #allocation4 [shape = 's32[1]{0}', space=sflag, size = 0x4, scoped, tag = 'scoped memory for tpu_custom_call.1']
    #allocation5 [shape = 'u8[1048576]{0}', space=vmem, size = 0x100000, scoped, tag = 'input window, operand 1, single buffered']
    #allocation6 [shape = 's32[1]{0}', space=sflag, size = 0x4, scoped, tag = 'scoped memory for tpu_custom_call.1']
    #allocation7 [shape = 'u8[4096]{0}', space=vmem, size = 0x1000, scoped, tag = 'output window, operand 0, single buffered']
    %8 = vsyncpa [#allocation3], 0
    %9 = vsyncpa [#allocation6], 0
    %10 = vsyncpa [#allocation4], 0
    // Predicated region
    $region2: #{tpu_custom_call.1} parent=1 // pred_check
      _
    $region3: #{tpu_custom_call.1} parent=1 // pred_check_branch
      %12 = sbr.rel (0) target = $region5
    $region4: #{tpu_custom_call.1} parent=1 // pred_region
      %s14 = ssub.s32 2048, 2048
      %15 = vsyncadd [#allocation3], %s14
      %s17 = sshll.u32 [#allocation2], 4
      %s18 = int_to_ptr.vmem [resolvable:$true] %s17
      %20 = dma.hbm_to_vmem [thread:$0]  %s0, 2048, %s18, [#allocation3]
    $region5: #{tpu_custom_call.1} parent=1 // pred_fallthru
      _
    // Predicated region
    $region6: #{tpu_custom_call.1} parent=1 // pred_check
      _
    $region7: #{tpu_custom_call.1} parent=1 // pred_check_branch
      %22 = sbr.rel (0) target = $region9
    $region8: #{tpu_custom_call.1} parent=1 // pred_region
      %s24 = ssub.s32 32768, 32768
      %25 = vsyncadd [#allocation6], %s24
      %s26 = sshll.u32 [#allocation5], 4
      %s27 = int_to_ptr.vmem [resolvable:$true] %s26
      %32 = dma.hbm_to_vmem [thread:$0]  %s1, 32768, %s27, [#allocation6], 128, 128, 8
    $region9: #{tpu_custom_call.1} parent=1 // pred_fallthru
      _
    // Predicated region
    $region10: #{tpu_custom_call.1} parent=1 // pred_check
      _
    $region11: #{tpu_custom_call.1} parent=1 // pred_check_branch
      %34 = sbr.rel (0) target = $region13
    $region12: #{tpu_custom_call.1} parent=1 // pred_region
      _
    $region13: #{tpu_custom_call.1} parent=1 // pred_fallthru
      _
    // Predicated region
    $region14: #{tpu_custom_call.1} parent=1 // pred_check
      _
    $region15: #{tpu_custom_call.1} parent=1 // pred_check_branch
      %36 = sbr.rel (0) target = $region17
    $region16: #{tpu_custom_call.1} parent=1 // pred_region
      %37 = dma.done [#allocation3], 2048
    $region17: #{tpu_custom_call.1} parent=1 // pred_fallthru
      _
    // Predicated region
    $region18: #{tpu_custom_call.1} parent=1 // pred_check
      _
    $region19: #{tpu_custom_call.1} parent=1 // pred_check_branch
      %39 = sbr.rel (0) target = $region21
    $region20: #{tpu_custom_call.1} parent=1 // pred_region
      %40 = dma.done [#allocation6], 32768
    $region21: #{tpu_custom_call.1} parent=1 // pred_fallthru
      _
    %v41 = vld [vmem:[#allocation2] sm:$0x1f]
    %v42 = vld [vmem:[#allocation2 + $0x8] sm:$0x1f]
    %v43 = vld [vmem:[#allocation2 + $0x10] sm:$0x1f]
    %v44 = vld [vmem:[#allocation2 + $0x18] sm:$0x1f]
    %v45 = vld [vmem:[#allocation2 + $0x20] sm:$0x1f]
    %v46 = vld [vmem:[#allocation2 + $0x28] sm:$0x1f]
    %v47 = vld [vmem:[#allocation2 + $0x30] sm:$0x1f]
    %v48 = vld [vmem:[#allocation2 + $0x38] sm:$0x1f]
    %v49 = vld [vmem:[#allocation2 + $0x40] sm:$0x1f]
    %v50 = vld [vmem:[#allocation2 + $0x48] sm:$0x1f]
    %v51 = vld [vmem:[#allocation2 + $0x50] sm:$0x1f]
    %v52 = vld [vmem:[#allocation2 + $0x58] sm:$0x1f]
    %v53 = vld [vmem:[#allocation2 + $0x60] sm:$0x1f]
    %v54 = vld [vmem:[#allocation2 + $0x68] sm:$0x1f]
    %v55 = vld [vmem:[#allocation2 + $0x70] sm:$0x1f]
    %v56 = vld [vmem:[#allocation2 + $0x78] sm:$0x1f]
    %v57 = vld [vmem:[#allocation5] sm:$0xff]
    %v58 = vld [vmem:[#allocation5 + $0x8] sm:$0xff]
    %v59 = vld [vmem:[#allocation5 + $0x10] sm:$0xff]
    %v60 = vld [vmem:[#allocation5 + $0x18] sm:$0xff]
    %v61 = vld [vmem:[#allocation5 + $0x20] sm:$0xff]
    %v62 = vld [vmem:[#allocation5 + $0x28] sm:$0xff]
    %v63 = vld [vmem:[#allocation5 + $0x30] sm:$0xff]
    %v64 = vld [vmem:[#allocation5 + $0x38] sm:$0xff]
    %v65 = vld [vmem:[#allocation5 + $0x40] sm:$0xff]
    %v66 = vld [vmem:[#allocation5 + $0x48] sm:$0xff]
    %v67 = vld [vmem:[#allocation5 + $0x50] sm:$0xff]
    %v68 = vld [vmem:[#allocation5 + $0x58] sm:$0xff]
    %v69 = vld [vmem:[#allocation5 + $0x60] sm:$0xff]
    %v70 = vld [vmem:[#allocation5 + $0x68] sm:$0xff]
    %v71 = vld [vmem:[#allocation5 + $0x70] sm:$0xff]
    %v72 = vld [vmem:[#allocation5 + $0x78] sm:$0xff]
    %v73 = vld [vmem:[#allocation5 + $0x80] sm:$0xff]
    %v74 = vld [vmem:[#allocation5 + $0x88] sm:$0xff]
    %v75 = vld [vmem:[#allocation5 + $0x90] sm:$0xff]
    %v76 = vld [vmem:[#allocation5 + $0x98] sm:$0xff]
    %v77 = vld [vmem:[#allocation5 + $0xa0] sm:$0xff]
    %v78 = vld [vmem:[#allocation5 + $0xa8] sm:$0xff]
    %v79 = vld [vmem:[#allocation5 + $0xb0] sm:$0xff]
    %v80 = vld [vmem:[#allocation5 + $0xb8] sm:$0xff]
    %v81 = vld [vmem:[#allocation5 + $0xc0] sm:$0xff]
    %v82 = vld [vmem:[#allocation5 + $0xc8] sm:$0xff]
    %v83 = vld [vmem:[#allocation5 + $0xd0] sm:$0xff]
    %v84 = vld [vmem:[#allocation5 + $0xd8] sm:$0xff]
    %v85 = vld [vmem:[#allocation5 + $0xe0] sm:$0xff]
    %v86 = vld [vmem:[#allocation5 + $0xe8] sm:$0xff]
    %v87 = vld [vmem:[#allocation5 + $0xf0] sm:$0xff]
    %v88 = vld [vmem:[#allocation5 + $0xf8] sm:$0xff]
    %v89 = vld [vmem:[#allocation5 + $0x100] sm:$0xff]
    %v90 = vld [vmem:[#allocation5 + $0x108] sm:$0xff]
    %v91 = vld [vmem:[#allocation5 + $0x110] sm:$0xff]
    %v92 = vld [vmem:[#allocation5 + $0x118] sm:$0xff]
    %v93 = vld [vmem:[#allocation5 + $0x120] sm:$0xff]
    %v94 = vld [vmem:[#allocation5 + $0x128] sm:$0xff]
    %v95 = vld [vmem:[#allocation5 + $0x130] sm:$0xff]
    %v96 = vld [vmem:[#allocation5 + $0x138] sm:$0xff]
    %v97 = vld [vmem:[#allocation5 + $0x140] sm:$0xff]
    %v98 = vld [vmem:[#allocation5 + $0x148] sm:$0xff]
    %v99 = vld [vmem:[#allocation5 + $0x150] sm:$0xff]
    %v100 = vld [vmem:[#allocation5 + $0x158] sm:$0xff]
    %v101 = vld [vmem:[#allocation5 + $0x160] sm:$0xff]
    %v102 = vld [vmem:[#allocation5 + $0x168] sm:$0xff]
    %v103 = vld [vmem:[#allocation5 + $0x170] sm:$0xff]
    %v104 = vld [vmem:[#allocation5 + $0x178] sm:$0xff]
    %v105 = vld [vmem:[#allocation5 + $0x180] sm:$0xff]
    %v106 = vld [vmem:[#allocation5 + $0x188] sm:$0xff]
    %v107 = vld [vmem:[#allocation5 + $0x190] sm:$0xff]
    %v108 = vld [vmem:[#allocation5 + $0x198] sm:$0xff]
    %v109 = vld [vmem:[#allocation5 + $0x1a0] sm:$0xff]
    %v110 = vld [vmem:[#allocation5 + $0x1a8] sm:$0xff]
    %v111 = vld [vmem:[#allocation5 + $0x1b0] sm:$0xff]
    %v112 = vld [vmem:[#allocation5 + $0x1b8] sm:$0xff]
    %v113 = vld [vmem:[#allocation5 + $0x1c0] sm:$0xff]
    %v114 = vld [vmem:[#allocation5 + $0x1c8] sm:$0xff]
    %v115 = vld [vmem:[#allocation5 + $0x1d0] sm:$0xff]
    %v116 = vld [vmem:[#allocation5 + $0x1d8] sm:$0xff]
    %v117 = vld [vmem:[#allocation5 + $0x1e0] sm:$0xff]
    %v118 = vld [vmem:[#allocation5 + $0x1e8] sm:$0xff]
    %v119 = vld [vmem:[#allocation5 + $0x1f0] sm:$0xff]
    %v120 = vld [vmem:[#allocation5 + $0x1f8] sm:$0xff]
    %v121 = vld [vmem:[#allocation5 + $0x200] sm:$0xff]
    %v122 = vld [vmem:[#allocation5 + $0x208] sm:$0xff]
    %v123 = vld [vmem:[#allocation5 + $0x210] sm:$0xff]
    %v124 = vld [vmem:[#allocation5 + $0x218] sm:$0xff]
    %v125 = vld [vmem:[#allocation5 + $0x220] sm:$0xff]
    %v126 = vld [vmem:[#allocation5 + $0x228] sm:$0xff]
    %v127 = vld [vmem:[#allocation5 + $0x230] sm:$0xff]
    %v128 = vld [vmem:[#allocation5 + $0x238] sm:$0xff]
    %v129 = vld [vmem:[#allocation5 + $0x240] sm:$0xff]
    %v130 = vld [vmem:[#allocation5 + $0x248] sm:$0xff]
    %v131 = vld [vmem:[#allocation5 + $0x250] sm:$0xff]
    %v132 = vld [vmem:[#allocation5 + $0x258] sm:$0xff]
    %v133 = vld [vmem:[#allocation5 + $0x260] sm:$0xff]
    %v134 = vld [vmem:[#allocation5 + $0x268] sm:$0xff]
    %v135 = vld [vmem:[#allocation5 + $0x270] sm:$0xff]
    %v136 = vld [vmem:[#allocation5 + $0x278] sm:$0xff]
    %v137 = vld [vmem:[#allocation5 + $0x280] sm:$0xff]
    %v138 = vld [vmem:[#allocation5 + $0x288] sm:$0xff]
    %v139 = vld [vmem:[#allocation5 + $0x290] sm:$0xff]
    %v140 = vld [vmem:[#allocation5 + $0x298] sm:$0xff]
    %v141 = vld [vmem:[#allocation5 + $0x2a0] sm:$0xff]
    %v142 = vld [vmem:[#allocation5 + $0x2a8] sm:$0xff]
    %v143 = vld [vmem:[#allocation5 + $0x2b0] sm:$0xff]
    %v144 = vld [vmem:[#allocation5 + $0x2b8] sm:$0xff]
    %v145 = vld [vmem:[#allocation5 + $0x2c0] sm:$0xff]
    %v146 = vld [vmem:[#allocation5 + $0x2c8] sm:$0xff]
    %v147 = vld [vmem:[#allocation5 + $0x2d0] sm:$0xff]
    %v148 = vld [vmem:[#allocation5 + $0x2d8] sm:$0xff]
    %v149 = vld [vmem:[#allocation5 + $0x2e0] sm:$0xff]
    %v150 = vld [vmem:[#allocation5 + $0x2e8] sm:$0xff]
    %v151 = vld [vmem:[#allocation5 + $0x2f0] sm:$0xff]
    %v152 = vld [vmem:[#allocation5 + $0x2f8] sm:$0xff]
    %v153 = vld [vmem:[#allocation5 + $0x300] sm:$0xff]
    %v154 = vld [vmem:[#allocation5 + $0x308] sm:$0xff]
    %v155 = vld [vmem:[#allocation5 + $0x310] sm:$0xff]
    %v156 = vld [vmem:[#allocation5 + $0x318] sm:$0xff]
    %v157 = vld [vmem:[#allocation5 + $0x320] sm:$0xff]
    %v158 = vld [vmem:[#allocation5 + $0x328] sm:$0xff]
    %v159 = vld [vmem:[#allocation5 + $0x330] sm:$0xff]
    %v160 = vld [vmem:[#allocation5 + $0x338] sm:$0xff]
    %v161 = vld [vmem:[#allocation5 + $0x340] sm:$0xff]
    %v162 = vld [vmem:[#allocation5 + $0x348] sm:$0xff]
    %v163 = vld [vmem:[#allocation5 + $0x350] sm:$0xff]
    %v164 = vld [vmem:[#allocation5 + $0x358] sm:$0xff]
    %v165 = vld [vmem:[#allocation5 + $0x360] sm:$0xff]
    %v166 = vld [vmem:[#allocation5 + $0x368] sm:$0xff]
    %v167 = vld [vmem:[#allocation5 + $0x370] sm:$0xff]
    %v168 = vld [vmem:[#allocation5 + $0x378] sm:$0xff]
    %v169 = vld [vmem:[#allocation5 + $0x380] sm:$0xff]
    %v170 = vld [vmem:[#allocation5 + $0x388] sm:$0xff]
    %v171 = vld [vmem:[#allocation5 + $0x390] sm:$0xff]
    %v172 = vld [vmem:[#allocation5 + $0x398] sm:$0xff]
    %v173 = vld [vmem:[#allocation5 + $0x3a0] sm:$0xff]
    %v174 = vld [vmem:[#allocation5 + $0x3a8] sm:$0xff]
    %v175 = vld [vmem:[#allocation5 + $0x3b0] sm:$0xff]
    %v176 = vld [vmem:[#allocation5 + $0x3b8] sm:$0xff]
    %v177 = vld [vmem:[#allocation5 + $0x3c0] sm:$0xff]
    %v178 = vld [vmem:[#allocation5 + $0x3c8] sm:$0xff]
    %v179 = vld [vmem:[#allocation5 + $0x3d0] sm:$0xff]
    %v180 = vld [vmem:[#allocation5 + $0x3d8] sm:$0xff]
    %v181 = vld [vmem:[#allocation5 + $0x3e0] sm:$0xff]
    %v182 = vld [vmem:[#allocation5 + $0x3e8] sm:$0xff]
    %v183 = vld [vmem:[#allocation5 + $0x3f0] sm:$0xff]
    %v184 = vld [vmem:[#allocation5 + $0x3f8] sm:$0xff]
    %v185 = vld [vmem:[#allocation5 + $0x400] sm:$0xff]
    %v186 = vld [vmem:[#allocation5 + $0x408] sm:$0xff]
    %v187 = vld [vmem:[#allocation5 + $0x410] sm:$0xff]
    %v188 = vld [vmem:[#allocation5 + $0x418] sm:$0xff]
    %v189 = vld [vmem:[#allocation5 + $0x420] sm:$0xff]
    %v190 = vld [vmem:[#allocation5 + $0x428] sm:$0xff]
    %v191 = vld [vmem:[#allocation5 + $0x430] sm:$0xff]
    %v192 = vld [vmem:[#allocation5 + $0x438] sm:$0xff]
    %v193 = vld [vmem:[#allocation5 + $0x440] sm:$0xff]
    %v194 = vld [vmem:[#allocation5 + $0x448] sm:$0xff]
    %v195 = vld [vmem:[#allocation5 + $0x450] sm:$0xff]
    %v196 = vld [vmem:[#allocation5 + $0x458] sm:$0xff]
    %v197 = vld [vmem:[#allocation5 + $0x460] sm:$0xff]
    %v198 = vld [vmem:[#allocation5 + $0x468] sm:$0xff]
    %v199 = vld [vmem:[#allocation5 + $0x470] sm:$0xff]
    %v200 = vld [vmem:[#allocation5 + $0x478] sm:$0xff]
    %v201 = vld [vmem:[#allocation5 + $0x480] sm:$0xff]
    %v202 = vld [vmem:[#allocation5 + $0x488] sm:$0xff]
    %v203 = vld [vmem:[#allocation5 + $0x490] sm:$0xff]
    %v204 = vld [vmem:[#allocation5 + $0x498] sm:$0xff]
    %v205 = vld [vmem:[#allocation5 + $0x4a0] sm:$0xff]
    %v206 = vld [vmem:[#allocation5 + $0x4a8] sm:$0xff]
    %v207 = vld [vmem:[#allocation5 + $0x4b0] sm:$0xff]
    %v208 = vld [vmem:[#allocation5 + $0x4b8] sm:$0xff]
    %v209 = vld [vmem:[#allocation5 + $0x4c0] sm:$0xff]
    %v210 = vld [vmem:[#allocation5 + $0x4c8] sm:$0xff]
    %v211 = vld [vmem:[#allocation5 + $0x4d0] sm:$0xff]
    %v212 = vld [vmem:[#allocation5 + $0x4d8] sm:$0xff]
    %v213 = vld [vmem:[#allocation5 + $0x4e0] sm:$0xff]
    %v214 = vld [vmem:[#allocation5 + $0x4e8] sm:$0xff]
    %v215 = vld [vmem:[#allocation5 + $0x4f0] sm:$0xff]
    %v216 = vld [vmem:[#allocation5 + $0x4f8] sm:$0xff]
    %v217 = vld [vmem:[#allocation5 + $0x500] sm:$0xff]
    %v218 = vld [vmem:[#allocation5 + $0x508] sm:$0xff]
    %v219 = vld [vmem:[#allocation5 + $0x510] sm:$0xff]
    %v220 = vld [vmem:[#allocation5 + $0x518] sm:$0xff]
    %v221 = vld [vmem:[#allocation5 + $0x520] sm:$0xff]
    %v222 = vld [vmem:[#allocation5 + $0x528] sm:$0xff]
    %v223 = vld [vmem:[#allocation5 + $0x530] sm:$0xff]
    %v224 = vld [vmem:[#allocation5 + $0x538] sm:$0xff]
    %v225 = vld [vmem:[#allocation5 + $0x540] sm:$0xff]
    %v226 = vld [vmem:[#allocation5 + $0x548] sm:$0xff]
    %v227 = vld [vmem:[#allocation5 + $0x550] sm:$0xff]
    %v228 = vld [vmem:[#allocation5 + $0x558] sm:$0xff]
    %v229 = vld [vmem:[#allocation5 + $0x560] sm:$0xff]
    %v230 = vld [vmem:[#allocation5 + $0x568] sm:$0xff]
    %v231 = vld [vmem:[#allocation5 + $0x570] sm:$0xff]
    %v232 = vld [vmem:[#allocation5 + $0x578] sm:$0xff]
    %v233 = vld [vmem:[#allocation5 + $0x580] sm:$0xff]
    %v234 = vld [vmem:[#allocation5 + $0x588] sm:$0xff]
    %v235 = vld [vmem:[#allocation5 + $0x590] sm:$0xff]
    %v236 = vld [vmem:[#allocation5 + $0x598] sm:$0xff]
    %v237 = vld [vmem:[#allocation5 + $0x5a0] sm:$0xff]
    %v238 = vld [vmem:[#allocation5 + $0x5a8] sm:$0xff]
    %v239 = vld [vmem:[#allocation5 + $0x5b0] sm:$0xff]
    %v240 = vld [vmem:[#allocation5 + $0x5b8] sm:$0xff]
    %v241 = vld [vmem:[#allocation5 + $0x5c0] sm:$0xff]
    %v242 = vld [vmem:[#allocation5 + $0x5c8] sm:$0xff]
    %v243 = vld [vmem:[#allocation5 + $0x5d0] sm:$0xff]
    %v244 = vld [vmem:[#allocation5 + $0x5d8] sm:$0xff]
    %v245 = vld [vmem:[#allocation5 + $0x5e0] sm:$0xff]
    %v246 = vld [vmem:[#allocation5 + $0x5e8] sm:$0xff]
    %v247 = vld [vmem:[#allocation5 + $0x5f0] sm:$0xff]
    %v248 = vld [vmem:[#allocation5 + $0x5f8] sm:$0xff]
    %v249 = vld [vmem:[#allocation5 + $0x600] sm:$0xff]
    %v250 = vld [vmem:[#allocation5 + $0x608] sm:$0xff]
    %v251 = vld [vmem:[#allocation5 + $0x610] sm:$0xff]
    %v252 = vld [vmem:[#allocation5 + $0x618] sm:$0xff]
    %v253 = vld [vmem:[#allocation5 + $0x620] sm:$0xff]
    %v254 = vld [vmem:[#allocation5 + $0x628] sm:$0xff]
    %v255 = vld [vmem:[#allocation5 + $0x630] sm:$0xff]
    %v256 = vld [vmem:[#allocation5 + $0x638] sm:$0xff]
    %v257 = vld [vmem:[#allocation5 + $0x640] sm:$0xff]
    %v258 = vld [vmem:[#allocation5 + $0x648] sm:$0xff]
    %v259 = vld [vmem:[#allocation5 + $0x650] sm:$0xff]
    %v260 = vld [vmem:[#allocation5 + $0x658] sm:$0xff]
    %v261 = vld [vmem:[#allocation5 + $0x660] sm:$0xff]
    %v262 = vld [vmem:[#allocation5 + $0x668] sm:$0xff]
    %v263 = vld [vmem:[#allocation5 + $0x670] sm:$0xff]
    %v264 = vld [vmem:[#allocation5 + $0x678] sm:$0xff]
    %v265 = vld [vmem:[#allocation5 + $0x680] sm:$0xff]
    %v266 = vld [vmem:[#allocation5 + $0x688] sm:$0xff]
    %v267 = vld [vmem:[#allocation5 + $0x690] sm:$0xff]
    %v268 = vld [vmem:[#allocation5 + $0x698] sm:$0xff]
    %v269 = vld [vmem:[#allocation5 + $0x6a0] sm:$0xff]
    %v270 = vld [vmem:[#allocation5 + $0x6a8] sm:$0xff]
    %v271 = vld [vmem:[#allocation5 + $0x6b0] sm:$0xff]
    %v272 = vld [vmem:[#allocation5 + $0x6b8] sm:$0xff]
    %v273 = vld [vmem:[#allocation5 + $0x6c0] sm:$0xff]
    %v274 = vld [vmem:[#allocation5 + $0x6c8] sm:$0xff]
    %v275 = vld [vmem:[#allocation5 + $0x6d0] sm:$0xff]
    %v276 = vld [vmem:[#allocation5 + $0x6d8] sm:$0xff]
    %v277 = vld [vmem:[#allocation5 + $0x6e0] sm:$0xff]
    %v278 = vld [vmem:[#allocation5 + $0x6e8] sm:$0xff]
    %v279 = vld [vmem:[#allocation5 + $0x6f0] sm:$0xff]
    %v280 = vld [vmem:[#allocation5 + $0x6f8] sm:$0xff]
    %v281 = vld [vmem:[#allocation5 + $0x700] sm:$0xff]
    %v282 = vld [vmem:[#allocation5 + $0x708] sm:$0xff]
    %v283 = vld [vmem:[#allocation5 + $0x710] sm:$0xff]
    %v284 = vld [vmem:[#allocation5 + $0x718] sm:$0xff]
    %v285 = vld [vmem:[#allocation5 + $0x720] sm:$0xff]
    %v286 = vld [vmem:[#allocation5 + $0x728] sm:$0xff]
    %v287 = vld [vmem:[#allocation5 + $0x730] sm:$0xff]
    %v288 = vld [vmem:[#allocation5 + $0x738] sm:$0xff]
    %v289 = vld [vmem:[#allocation5 + $0x740] sm:$0xff]
    %v290 = vld [vmem:[#allocation5 + $0x748] sm:$0xff]
    %v291 = vld [vmem:[#allocation5 + $0x750] sm:$0xff]
    %v292 = vld [vmem:[#allocation5 + $0x758] sm:$0xff]
    %v293 = vld [vmem:[#allocation5 + $0x760] sm:$0xff]
    %v294 = vld [vmem:[#allocation5 + $0x768] sm:$0xff]
    %v295 = vld [vmem:[#allocation5 + $0x770] sm:$0xff]
    %v296 = vld [vmem:[#allocation5 + $0x778] sm:$0xff]
    %v297 = vld [vmem:[#allocation5 + $0x780] sm:$0xff]
    %v298 = vld [vmem:[#allocation5 + $0x788] sm:$0xff]
    %v299 = vld [vmem:[#allocation5 + $0x790] sm:$0xff]
    %v300 = vld [vmem:[#allocation5 + $0x798] sm:$0xff]
    %v301 = vld [vmem:[#allocation5 + $0x7a0] sm:$0xff]
    %v302 = vld [vmem:[#allocation5 + $0x7a8] sm:$0xff]
    %v303 = vld [vmem:[#allocation5 + $0x7b0] sm:$0xff]
    %v304 = vld [vmem:[#allocation5 + $0x7b8] sm:$0xff]
    %v305 = vld [vmem:[#allocation5 + $0x7c0] sm:$0xff]
    %v306 = vld [vmem:[#allocation5 + $0x7c8] sm:$0xff]
    %v307 = vld [vmem:[#allocation5 + $0x7d0] sm:$0xff]
    %v308 = vld [vmem:[#allocation5 + $0x7d8] sm:$0xff]
    %v309 = vld [vmem:[#allocation5 + $0x7e0] sm:$0xff]
    %v310 = vld [vmem:[#allocation5 + $0x7e8] sm:$0xff]
    %v311 = vld [vmem:[#allocation5 + $0x7f0] sm:$0xff]
    %v312 = vld [vmem:[#allocation5 + $0x7f8] sm:$0xff]
    %v313 = vld [vmem:[%s2] sm:$0x1]
    %v315 = vlaneseq
    %v316 = vshrl.u32 %v315, 7
    %v317 = vsub.s32 0, %v316
    %v318 = vrot.slane %v313, %v317
    %320 = vmatprep.subr.mxu0 0.0
    %321 = vmatpush1.msra.mxu0 %v57
    %322 = vmatprep.subr.mxu0 0.0
    %323 = vmatpush1.msra.mxu0 %v58
    %324 = vmatprep.subr.mxu0 0.0
    %325 = vmatpush1.msra.mxu0 %v59
    %326 = vmatprep.subr.mxu0 0.0
    %327 = vmatpush1.msra.mxu0 %v60
    %328 = vmatprep.subr.mxu0 0.0
    %329 = vmatpush1.msra.mxu0 %v61
    %330 = vmatprep.subr.mxu0 0.0
    %331 = vmatpush1.msra.mxu0 %v62
    %332 = vmatprep.subr.mxu0 0.0
    %333 = vmatpush1.msra.mxu0 %v63
    %334 = vmatprep.subr.mxu0 0.0
    %335 = vmatpush1.msra.mxu0 %v64
    %336 = vmatprep.subr.mxu0 0.0
    %337 = vmatpush1.msra.mxu0 %v65
    %338 = vmatprep.subr.mxu0 0.0
    %339 = vmatpush1.msra.mxu0 %v66
    %340 = vmatprep.subr.mxu0 0.0
    %341 = vmatpush1.msra.mxu0 %v67
    %342 = vmatprep.subr.mxu0 0.0
    %343 = vmatpush1.msra.mxu0 %v68
    %344 = vmatprep.subr.mxu0 0.0
    %345 = vmatpush1.msra.mxu0 %v69
    %346 = vmatprep.subr.mxu0 0.0
    %347 = vmatpush1.msra.mxu0 %v70
    %348 = vmatprep.subr.mxu0 0.0
    %349 = vmatpush1.msra.mxu0 %v71
    %350 = vmatprep.subr.mxu0 0.0
    %351 = vmatpush1.msra.mxu0 %v72
    %352 = vmatprep.subr.mxu0 0.0
    %353 = vmatpush1.msra.mxu0 %v73
    %354 = vmatprep.subr.mxu0 0.0
    %355 = vmatpush1.msra.mxu0 %v74
    %356 = vmatprep.subr.mxu0 0.0
    %357 = vmatpush1.msra.mxu0 %v75
    %358 = vmatprep.subr.mxu0 0.0
    %359 = vmatpush1.msra.mxu0 %v76
    %360 = vmatprep.subr.mxu0 0.0
    %361 = vmatpush1.msra.mxu0 %v77
    %362 = vmatprep.subr.mxu0 0.0
    %363 = vmatpush1.msra.mxu0 %v78
    %364 = vmatprep.subr.mxu0 0.0
    %365 = vmatpush1.msra.mxu0 %v79
    %366 = vmatprep.subr.mxu0 0.0
    %367 = vmatpush1.msra.mxu0 %v80
    %368 = vmatprep.subr.mxu0 0.0
    %369 = vmatpush1.msra.mxu0 %v81
    %370 = vmatprep.subr.mxu0 0.0
    %371 = vmatpush1.msra.mxu0 %v82
    %372 = vmatprep.subr.mxu0 0.0
    %373 = vmatpush1.msra.mxu0 %v83
    %374 = vmatprep.subr.mxu0 0.0
    %375 = vmatpush1.msra.mxu0 %v84
    %376 = vmatprep.subr.mxu0 0.0
    %377 = vmatpush1.msra.mxu0 %v85
    %378 = vmatprep.subr.mxu0 0.0
    %379 = vmatpush1.msra.mxu0 %v86
    %380 = vmatprep.subr.mxu0 0.0
    %381 = vmatpush1.msra.mxu0 %v87
    %382 = vmatprep.subr.mxu0 0.0
    %383 = vmatpush1.msra.mxu0 %v88
    %384 = vmatprep.mubr.f32.mxu0 %v42
    %385 = vmatmul.mubr.f32.gmra.mrb[0].mxu0 %v41
    %v386 = vpop.f32.mrb[0].mxu0
    %v387 = vadd.f32 %v318, %v386
    %v388 = vpop.f32.mrb[0].mxu0
    %389 = vdwg.mxu0
    %390 = vmatprep.subr.mxu0 0.0
    %391 = vmatpush1.msra.mxu0 %v89
    %392 = vmatprep.subr.mxu0 0.0
    %393 = vmatpush1.msra.mxu0 %v90
    %394 = vmatprep.subr.mxu0 0.0
    %395 = vmatpush1.msra.mxu0 %v91
    %396 = vmatprep.subr.mxu0 0.0
    %397 = vmatpush1.msra.mxu0 %v92
    %398 = vmatprep.subr.mxu0 0.0
    %399 = vmatpush1.msra.mxu0 %v93
    %400 = vmatprep.subr.mxu0 0.0
    %401 = vmatpush1.msra.mxu0 %v94
    %402 = vmatprep.subr.mxu0 0.0
    %403 = vmatpush1.msra.mxu0 %v95
    %404 = vmatprep.subr.mxu0 0.0
    %405 = vmatpush1.msra.mxu0 %v96
    %406 = vmatprep.subr.mxu0 0.0
    %407 = vmatpush1.msra.mxu0 %v97
    %408 = vmatprep.subr.mxu0 0.0
    %409 = vmatpush1.msra.mxu0 %v98
    %410 = vmatprep.subr.mxu0 0.0
    %411 = vmatpush1.msra.mxu0 %v99
    %412 = vmatprep.subr.mxu0 0.0
    %413 = vmatpush1.msra.mxu0 %v100
    %414 = vmatprep.subr.mxu0 0.0
    %415 = vmatpush1.msra.mxu0 %v101
    %416 = vmatprep.subr.mxu0 0.0
    %417 = vmatpush1.msra.mxu0 %v102
    %418 = vmatprep.subr.mxu0 0.0
    %419 = vmatpush1.msra.mxu0 %v103
    %420 = vmatprep.subr.mxu0 0.0
    %421 = vmatpush1.msra.mxu0 %v104
    %422 = vmatprep.subr.mxu0 0.0
    %423 = vmatpush1.msra.mxu0 %v105
    %424 = vmatprep.subr.mxu0 0.0
    %425 = vmatpush1.msra.mxu0 %v106
    %426 = vmatprep.subr.mxu0 0.0
    %427 = vmatpush1.msra.mxu0 %v107
    %428 = vmatprep.subr.mxu0 0.0
    %429 = vmatpush1.msra.mxu0 %v108
    %430 = vmatprep.subr.mxu0 0.0
    %431 = vmatpush1.msra.mxu0 %v109
    %432 = vmatprep.subr.mxu0 0.0
    %433 = vmatpush1.msra.mxu0 %v110
    %434 = vmatprep.subr.mxu0 0.0
    %435 = vmatpush1.msra.mxu0 %v111
    %436 = vmatprep.subr.mxu0 0.0
    %437 = vmatpush1.msra.mxu0 %v112
    %438 = vmatprep.subr.mxu0 0.0
    %439 = vmatpush1.msra.mxu0 %v113
    %440 = vmatprep.subr.mxu0 0.0
    %441 = vmatpush1.msra.mxu0 %v114
    %442 = vmatprep.subr.mxu0 0.0
    %443 = vmatpush1.msra.mxu0 %v115
    %444 = vmatprep.subr.mxu0 0.0
    %445 = vmatpush1.msra.mxu0 %v116
    %446 = vmatprep.subr.mxu0 0.0
    %447 = vmatpush1.msra.mxu0 %v117
    %448 = vmatprep.subr.mxu0 0.0
    %449 = vmatpush1.msra.mxu0 %v118
    %450 = vmatprep.subr.mxu0 0.0
    %451 = vmatpush1.msra.mxu0 %v119
    %452 = vmatprep.subr.mxu0 0.0
    %453 = vmatpush1.msra.mxu0 %v120
    %454 = vmatprep.mubr.f32.mxu0 %v44
    %455 = vmatmul.mubr.f32.gmra.mrb[0].mxu0 %v43
    %v456 = vpop.f32.mrb[0].mxu0
    %v457 = vadd.f32 %v387, %v456
    %v458 = vpop.f32.mrb[0].mxu0
    %459 = vdwg.mxu0
    %460 = vmatprep.subr.mxu0 0.0
    %461 = vmatpush1.msra.mxu0 %v121
    %462 = vmatprep.subr.mxu0 0.0
    %463 = vmatpush1.msra.mxu0 %v122
    %464 = vmatprep.subr.mxu0 0.0
    %465 = vmatpush1.msra.mxu0 %v123
    %466 = vmatprep.subr.mxu0 0.0
    %467 = vmatpush1.msra.mxu0 %v124
    %468 = vmatprep.subr.mxu0 0.0
    %469 = vmatpush1.msra.mxu0 %v125
    %470 = vmatprep.subr.mxu0 0.0
    %471 = vmatpush1.msra.mxu0 %v126
    %472 = vmatprep.subr.mxu0 0.0
    %473 = vmatpush1.msra.mxu0 %v127
    %474 = vmatprep.subr.mxu0 0.0
    %475 = vmatpush1.msra.mxu0 %v128
    %476 = vmatprep.subr.mxu0 0.0
    %477 = vmatpush1.msra.mxu0 %v129
    %478 = vmatprep.subr.mxu0 0.0
    %479 = vmatpush1.msra.mxu0 %v130
    %480 = vmatprep.subr.mxu0 0.0
    %481 = vmatpush1.msra.mxu0 %v131
    %482 = vmatprep.subr.mxu0 0.0
    %483 = vmatpush1.msra.mxu0 %v132
    %484 = vmatprep.subr.mxu0 0.0
    %485 = vmatpush1.msra.mxu0 %v133
    %486 = vmatprep.subr.mxu0 0.0
    %487 = vmatpush1.msra.mxu0 %v134
    %488 = vmatprep.subr.mxu0 0.0
    %489 = vmatpush1.msra.mxu0 %v135
    %490 = vmatprep.subr.mxu0 0.0
    %491 = vmatpush1.msra.mxu0 %v136
    %492 = vmatprep.subr.mxu0 0.0
    %493 = vmatpush1.msra.mxu0 %v137
    %494 = vmatprep.subr.mxu0 0.0
    %495 = vmatpush1.msra.mxu0 %v138
    %496 = vmatprep.subr.mxu0 0.0
    %497 = vmatpush1.msra.mxu0 %v139
    %498 = vmatprep.subr.mxu0 0.0
    %499 = vmatpush1.msra.mxu0 %v140
    %500 = vmatprep.subr.mxu0 0.0
    %501 = vmatpush1.msra.mxu0 %v141
    %502 = vmatprep.subr.mxu0 0.0
    %503 = vmatpush1.msra.mxu0 %v142
    %504 = vmatprep.subr.mxu0 0.0
    %505 = vmatpush1.msra.mxu0 %v143
    %506 = vmatprep.subr.mxu0 0.0
    %507 = vmatpush1.msra.mxu0 %v144
    %508 = vmatprep.subr.mxu0 0.0
    %509 = vmatpush1.msra.mxu0 %v145
    %510 = vmatprep.subr.mxu0 0.0
    %511 = vmatpush1.msra.mxu0 %v146
    %512 = vmatprep.subr.mxu0 0.0
    %513 = vmatpush1.msra.mxu0 %v147
    %514 = vmatprep.subr.mxu0 0.0
    %515 = vmatpush1.msra.mxu0 %v148
    %516 = vmatprep.subr.mxu0 0.0
    %517 = vmatpush1.msra.mxu0 %v149
    %518 = vmatprep.subr.mxu0 0.0
    %519 = vmatpush1.msra.mxu0 %v150
    %520 = vmatprep.subr.mxu0 0.0
    %521 = vmatpush1.msra.mxu0 %v151
    %522 = vmatprep.subr.mxu0 0.0
    %523 = vmatpush1.msra.mxu0 %v152
    %524 = vmatprep.mubr.f32.mxu0 %v46
    %525 = vmatmul.mubr.f32.gmra.mrb[0].mxu0 %v45
    %v526 = vpop.f32.mrb[0].mxu0
    %v527 = vadd.f32 %v457, %v526
    %v528 = vpop.f32.mrb[0].mxu0
    %529 = vdwg.mxu0
    %530 = vmatprep.subr.mxu0 0.0
    %531 = vmatpush1.msra.mxu0 %v153
    %532 = vmatprep.subr.mxu0 0.0
    %533 = vmatpush1.msra.mxu0 %v154
    %534 = vmatprep.subr.mxu0 0.0
    %535 = vmatpush1.msra.mxu0 %v155
    %536 = vmatprep.subr.mxu0 0.0
    %537 = vmatpush1.msra.mxu0 %v156
    %538 = vmatprep.subr.mxu0 0.0
    %539 = vmatpush1.msra.mxu0 %v157
    %540 = vmatprep.subr.mxu0 0.0
    %541 = vmatpush1.msra.mxu0 %v158
    %542 = vmatprep.subr.mxu0 0.0
    %543 = vmatpush1.msra.mxu0 %v159
    %544 = vmatprep.subr.mxu0 0.0
    %545 = vmatpush1.msra.mxu0 %v160
    %546 = vmatprep.subr.mxu0 0.0
    %547 = vmatpush1.msra.mxu0 %v161
    %548 = vmatprep.subr.mxu0 0.0
    %549 = vmatpush1.msra.mxu0 %v162
    %550 = vmatprep.subr.mxu0 0.0
    %551 = vmatpush1.msra.mxu0 %v163
    %552 = vmatprep.subr.mxu0 0.0
    %553 = vmatpush1.msra.mxu0 %v164
    %554 = vmatprep.subr.mxu0 0.0
    %555 = vmatpush1.msra.mxu0 %v165
    %556 = vmatprep.subr.mxu0 0.0
    %557 = vmatpush1.msra.mxu0 %v166
    %558 = vmatprep.subr.mxu0 0.0
    %559 = vmatpush1.msra.mxu0 %v167
    %560 = vmatprep.subr.mxu0 0.0
    %561 = vmatpush1.msra.mxu0 %v168
    %562 = vmatprep.subr.mxu0 0.0
    %563 = vmatpush1.msra.mxu0 %v169
    %564 = vmatprep.subr.mxu0 0.0
    %565 = vmatpush1.msra.mxu0 %v170
    %566 = vmatprep.subr.mxu0 0.0
    %567 = vmatpush1.msra.mxu0 %v171
    %568 = vmatprep.subr.mxu0 0.0
    %569 = vmatpush1.msra.mxu0 %v172
    %570 = vmatprep.subr.mxu0 0.0
    %571 = vmatpush1.msra.mxu0 %v173
    %572 = vmatprep.subr.mxu0 0.0
    %573 = vmatpush1.msra.mxu0 %v174
    %574 = vmatprep.subr.mxu0 0.0
    %575 = vmatpush1.msra.mxu0 %v175
    %576 = vmatprep.subr.mxu0 0.0
    %577 = vmatpush1.msra.mxu0 %v176
    %578 = vmatprep.subr.mxu0 0.0
    %579 = vmatpush1.msra.mxu0 %v177
    %580 = vmatprep.subr.mxu0 0.0
    %581 = vmatpush1.msra.mxu0 %v178
    %582 = vmatprep.subr.mxu0 0.0
    %583 = vmatpush1.msra.mxu0 %v179
    %584 = vmatprep.subr.mxu0 0.0
    %585 = vmatpush1.msra.mxu0 %v180
    %586 = vmatprep.subr.mxu0 0.0
    %587 = vmatpush1.msra.mxu0 %v181
    %588 = vmatprep.subr.mxu0 0.0
    %589 = vmatpush1.msra.mxu0 %v182
    %590 = vmatprep.subr.mxu0 0.0
    %591 = vmatpush1.msra.mxu0 %v183
    %592 = vmatprep.subr.mxu0 0.0
    %593 = vmatpush1.msra.mxu0 %v184
    %594 = vmatprep.mubr.f32.mxu0 %v48
    %595 = vmatmul.mubr.f32.gmra.mrb[0].mxu0 %v47
    %v596 = vpop.f32.mrb[0].mxu0
    %v597 = vadd.f32 %v527, %v596
    %v598 = vpop.f32.mrb[0].mxu0
    %599 = vdwg.mxu0
    %600 = vmatprep.subr.mxu0 0.0
    %601 = vmatpush1.msra.mxu0 %v185
    %602 = vmatprep.subr.mxu0 0.0
    %603 = vmatpush1.msra.mxu0 %v186
    %604 = vmatprep.subr.mxu0 0.0
    %605 = vmatpush1.msra.mxu0 %v187
    %606 = vmatprep.subr.mxu0 0.0
    %607 = vmatpush1.msra.mxu0 %v188
    %608 = vmatprep.subr.mxu0 0.0
    %609 = vmatpush1.msra.mxu0 %v189
    %610 = vmatprep.subr.mxu0 0.0
    %611 = vmatpush1.msra.mxu0 %v190
    %612 = vmatprep.subr.mxu0 0.0
    %613 = vmatpush1.msra.mxu0 %v191
    %614 = vmatprep.subr.mxu0 0.0
    %615 = vmatpush1.msra.mxu0 %v192
    %616 = vmatprep.subr.mxu0 0.0
    %617 = vmatpush1.msra.mxu0 %v193
    %618 = vmatprep.subr.mxu0 0.0
    %619 = vmatpush1.msra.mxu0 %v194
    %620 = vmatprep.subr.mxu0 0.0
    %621 = vmatpush1.msra.mxu0 %v195
    %622 = vmatprep.subr.mxu0 0.0
    %623 = vmatpush1.msra.mxu0 %v196
    %624 = vmatprep.subr.mxu0 0.0
    %625 = vmatpush1.msra.mxu0 %v197
    %626 = vmatprep.subr.mxu0 0.0
    %627 = vmatpush1.msra.mxu0 %v198
    %628 = vmatprep.subr.mxu0 0.0
    %629 = vmatpush1.msra.mxu0 %v199
    %630 = vmatprep.subr.mxu0 0.0
    %631 = vmatpush1.msra.mxu0 %v200
    %632 = vmatprep.subr.mxu0 0.0
    %633 = vmatpush1.msra.mxu0 %v201
    %634 = vmatprep.subr.mxu0 0.0
    %635 = vmatpush1.msra.mxu0 %v202
    %636 = vmatprep.subr.mxu0 0.0
    %637 = vmatpush1.msra.mxu0 %v203
    %638 = vmatprep.subr.mxu0 0.0
    %639 = vmatpush1.msra.mxu0 %v204
    %640 = vmatprep.subr.mxu0 0.0
    %641 = vmatpush1.msra.mxu0 %v205
    %642 = vmatprep.subr.mxu0 0.0
    %643 = vmatpush1.msra.mxu0 %v206
    %644 = vmatprep.subr.mxu0 0.0
    %645 = vmatpush1.msra.mxu0 %v207
    %646 = vmatprep.subr.mxu0 0.0
    %647 = vmatpush1.msra.mxu0 %v208
    %648 = vmatprep.subr.mxu0 0.0
    %649 = vmatpush1.msra.mxu0 %v209
    %650 = vmatprep.subr.mxu0 0.0
    %651 = vmatpush1.msra.mxu0 %v210
    %652 = vmatprep.subr.mxu0 0.0
    %653 = vmatpush1.msra.mxu0 %v211
    %654 = vmatprep.subr.mxu0 0.0
    %655 = vmatpush1.msra.mxu0 %v212
    %656 = vmatprep.subr.mxu0 0.0
    %657 = vmatpush1.msra.mxu0 %v213
    %658 = vmatprep.subr.mxu0 0.0
    %659 = vmatpush1.msra.mxu0 %v214
    %660 = vmatprep.subr.mxu0 0.0
    %661 = vmatpush1.msra.mxu0 %v215
    %662 = vmatprep.subr.mxu0 0.0
    %663 = vmatpush1.msra.mxu0 %v216
    %664 = vmatprep.mubr.f32.mxu0 %v50
    %665 = vmatmul.mubr.f32.gmra.mrb[0].mxu0 %v49
    %v666 = vpop.f32.mrb[0].mxu0
    %v667 = vadd.f32 %v597, %v666
    %v668 = vpop.f32.mrb[0].mxu0
    %669 = vdwg.mxu0
    %670 = vmatprep.subr.mxu0 0.0
    %671 = vmatpush1.msra.mxu0 %v217
    %672 = vmatprep.subr.mxu0 0.0
    %673 = vmatpush1.msra.mxu0 %v218
    %674 = vmatprep.subr.mxu0 0.0
    %675 = vmatpush1.msra.mxu0 %v219
    %676 = vmatprep.subr.mxu0 0.0
    %677 = vmatpush1.msra.mxu0 %v220
    %678 = vmatprep.subr.mxu0 0.0
    %679 = vmatpush1.msra.mxu0 %v221
    %680 = vmatprep.subr.mxu0 0.0
    %681 = vmatpush1.msra.mxu0 %v222
    %682 = vmatprep.subr.mxu0 0.0
    %683 = vmatpush1.msra.mxu0 %v223
    %684 = vmatprep.subr.mxu0 0.0
    %685 = vmatpush1.msra.mxu0 %v224
    %686 = vmatprep.subr.mxu0 0.0
    %687 = vmatpush1.msra.mxu0 %v225
    %688 = vmatprep.subr.mxu0 0.0
    %689 = vmatpush1.msra.mxu0 %v226
    %690 = vmatprep.subr.mxu0 0.0
    %691 = vmatpush1.msra.mxu0 %v227
    %692 = vmatprep.subr.mxu0 0.0
    %693 = vmatpush1.msra.mxu0 %v228
    %694 = vmatprep.subr.mxu0 0.0
    %695 = vmatpush1.msra.mxu0 %v229
    %696 = vmatprep.subr.mxu0 0.0
    %697 = vmatpush1.msra.mxu0 %v230
    %698 = vmatprep.subr.mxu0 0.0
    %699 = vmatpush1.msra.mxu0 %v231
    %700 = vmatprep.subr.mxu0 0.0
    %701 = vmatpush1.msra.mxu0 %v232
    %702 = vmatprep.subr.mxu0 0.0
    %703 = vmatpush1.msra.mxu0 %v233
    %704 = vmatprep.subr.mxu0 0.0
    %705 = vmatpush1.msra.mxu0 %v234
    %706 = vmatprep.subr.mxu0 0.0
    %707 = vmatpush1.msra.mxu0 %v235
    %708 = vmatprep.subr.mxu0 0.0
    %709 = vmatpush1.msra.mxu0 %v236
    %710 = vmatprep.subr.mxu0 0.0
    %711 = vmatpush1.msra.mxu0 %v237
    %712 = vmatprep.subr.mxu0 0.0
    %713 = vmatpush1.msra.mxu0 %v238
    %714 = vmatprep.subr.mxu0 0.0
    %715 = vmatpush1.msra.mxu0 %v239
    %716 = vmatprep.subr.mxu0 0.0
    %717 = vmatpush1.msra.mxu0 %v240
    %718 = vmatprep.subr.mxu0 0.0
    %719 = vmatpush1.msra.mxu0 %v241
    %720 = vmatprep.subr.mxu0 0.0
    %721 = vmatpush1.msra.mxu0 %v242
    %722 = vmatprep.subr.mxu0 0.0
    %723 = vmatpush1.msra.mxu0 %v243
    %724 = vmatprep.subr.mxu0 0.0
    %725 = vmatpush1.msra.mxu0 %v244
    %726 = vmatprep.subr.mxu0 0.0
    %727 = vmatpush1.msra.mxu0 %v245
    %728 = vmatprep.subr.mxu0 0.0
    %729 = vmatpush1.msra.mxu0 %v246
    %730 = vmatprep.subr.mxu0 0.0
    %731 = vmatpush1.msra.mxu0 %v247
    %732 = vmatprep.subr.mxu0 0.0
    %733 = vmatpush1.msra.mxu0 %v248
    %734 = vmatprep.mubr.f32.mxu0 %v52
    %735 = vmatmul.mubr.f32.gmra.mrb[0].mxu0 %v51
    %v736 = vpop.f32.mrb[0].mxu0
    %v737 = vadd.f32 %v667, %v736
    %v738 = vpop.f32.mrb[0].mxu0
    %739 = vdwg.mxu0
    %740 = vmatprep.subr.mxu0 0.0
    %741 = vmatpush1.msra.mxu0 %v249
    %742 = vmatprep.subr.mxu0 0.0
    %743 = vmatpush1.msra.mxu0 %v250
    %744 = vmatprep.subr.mxu0 0.0
    %745 = vmatpush1.msra.mxu0 %v251
    %746 = vmatprep.subr.mxu0 0.0
    %747 = vmatpush1.msra.mxu0 %v252
    %748 = vmatprep.subr.mxu0 0.0
    %749 = vmatpush1.msra.mxu0 %v253
    %750 = vmatprep.subr.mxu0 0.0
    %751 = vmatpush1.msra.mxu0 %v254
    %752 = vmatprep.subr.mxu0 0.0
    %753 = vmatpush1.msra.mxu0 %v255
    %754 = vmatprep.subr.mxu0 0.0
    %755 = vmatpush1.msra.mxu0 %v256
    %756 = vmatprep.subr.mxu0 0.0
    %757 = vmatpush1.msra.mxu0 %v257
    %758 = vmatprep.subr.mxu0 0.0
    %759 = vmatpush1.msra.mxu0 %v258
    %760 = vmatprep.subr.mxu0 0.0
    %761 = vmatpush1.msra.mxu0 %v259
    %762 = vmatprep.subr.mxu0 0.0
    %763 = vmatpush1.msra.mxu0 %v260
    %764 = vmatprep.subr.mxu0 0.0
    %765 = vmatpush1.msra.mxu0 %v261
    %766 = vmatprep.subr.mxu0 0.0
    %767 = vmatpush1.msra.mxu0 %v262
    %768 = vmatprep.subr.mxu0 0.0
    %769 = vmatpush1.msra.mxu0 %v263
    %770 = vmatprep.subr.mxu0 0.0
    %771 = vmatpush1.msra.mxu0 %v264
    %772 = vmatprep.subr.mxu0 0.0
    %773 = vmatpush1.msra.mxu0 %v265
    %774 = vmatprep.subr.mxu0 0.0
    %775 = vmatpush1.msra.mxu0 %v266
    %776 = vmatprep.subr.mxu0 0.0
    %777 = vmatpush1.msra.mxu0 %v267
    %778 = vmatprep.subr.mxu0 0.0
    %779 = vmatpush1.msra.mxu0 %v268
    %780 = vmatprep.subr.mxu0 0.0
    %781 = vmatpush1.msra.mxu0 %v269
    %782 = vmatprep.subr.mxu0 0.0
    %783 = vmatpush1.msra.mxu0 %v270
    %784 = vmatprep.subr.mxu0 0.0
    %785 = vmatpush1.msra.mxu0 %v271
    %786 = vmatprep.subr.mxu0 0.0
    %787 = vmatpush1.msra.mxu0 %v272
    %788 = vmatprep.subr.mxu0 0.0
    %789 = vmatpush1.msra.mxu0 %v273
    %790 = vmatprep.subr.mxu0 0.0
    %791 = vmatpush1.msra.mxu0 %v274
    %792 = vmatprep.subr.mxu0 0.0
    %793 = vmatpush1.msra.mxu0 %v275
    %794 = vmatprep.subr.mxu0 0.0
    %795 = vmatpush1.msra.mxu0 %v276
    %796 = vmatprep.subr.mxu0 0.0
    %797 = vmatpush1.msra.mxu0 %v277
    %798 = vmatprep.subr.mxu0 0.0
    %799 = vmatpush1.msra.mxu0 %v278
    %800 = vmatprep.subr.mxu0 0.0
    %801 = vmatpush1.msra.mxu0 %v279
    %802 = vmatprep.subr.mxu0 0.0
    %803 = vmatpush1.msra.mxu0 %v280
    %804 = vmatprep.mubr.f32.mxu0 %v54
    %805 = vmatmul.mubr.f32.gmra.mrb[0].mxu0 %v53
    %v806 = vpop.f32.mrb[0].mxu0
    %v807 = vadd.f32 %v737, %v806
    %v808 = vpop.f32.mrb[0].mxu0
    %809 = vdwg.mxu0
    %810 = vmatprep.subr.mxu0 0.0
    %811 = vmatpush1.msra.mxu0 %v281
    %812 = vmatprep.subr.mxu0 0.0
    %813 = vmatpush1.msra.mxu0 %v282
    %814 = vmatprep.subr.mxu0 0.0
    %815 = vmatpush1.msra.mxu0 %v283
    %816 = vmatprep.subr.mxu0 0.0
    %817 = vmatpush1.msra.mxu0 %v284
    %818 = vmatprep.subr.mxu0 0.0
    %819 = vmatpush1.msra.mxu0 %v285
    %820 = vmatprep.subr.mxu0 0.0
    %821 = vmatpush1.msra.mxu0 %v286
    %822 = vmatprep.subr.mxu0 0.0
    %823 = vmatpush1.msra.mxu0 %v287
    %824 = vmatprep.subr.mxu0 0.0
    %825 = vmatpush1.msra.mxu0 %v288
    %826 = vmatprep.subr.mxu0 0.0
    %827 = vmatpush1.msra.mxu0 %v289
    %828 = vmatprep.subr.mxu0 0.0
    %829 = vmatpush1.msra.mxu0 %v290
    %830 = vmatprep.subr.mxu0 0.0
    %831 = vmatpush1.msra.mxu0 %v291
    %832 = vmatprep.subr.mxu0 0.0
    %833 = vmatpush1.msra.mxu0 %v292
    %834 = vmatprep.subr.mxu0 0.0
    %835 = vmatpush1.msra.mxu0 %v293
    %836 = vmatprep.subr.mxu0 0.0
    %837 = vmatpush1.msra.mxu0 %v294
    %838 = vmatprep.subr.mxu0 0.0
    %839 = vmatpush1.msra.mxu0 %v295
    %840 = vmatprep.subr.mxu0 0.0
    %841 = vmatpush1.msra.mxu0 %v296
    %842 = vmatprep.subr.mxu0 0.0
    %843 = vmatpush1.msra.mxu0 %v297
    %844 = vmatprep.subr.mxu0 0.0
    %845 = vmatpush1.msra.mxu0 %v298
    %846 = vmatprep.subr.mxu0 0.0
    %847 = vmatpush1.msra.mxu0 %v299
    %848 = vmatprep.subr.mxu0 0.0
    %849 = vmatpush1.msra.mxu0 %v300
    %850 = vmatprep.subr.mxu0 0.0
    %851 = vmatpush1.msra.mxu0 %v301
    %852 = vmatprep.subr.mxu0 0.0
    %853 = vmatpush1.msra.mxu0 %v302
    %854 = vmatprep.subr.mxu0 0.0
    %855 = vmatpush1.msra.mxu0 %v303
    %856 = vmatprep.subr.mxu0 0.0
    %857 = vmatpush1.msra.mxu0 %v304
    %858 = vmatprep.subr.mxu0 0.0
    %859 = vmatpush1.msra.mxu0 %v305
    %860 = vmatprep.subr.mxu0 0.0
    %861 = vmatpush1.msra.mxu0 %v306
    %862 = vmatprep.subr.mxu0 0.0
    %863 = vmatpush1.msra.mxu0 %v307
    %864 = vmatprep.subr.mxu0 0.0
    %865 = vmatpush1.msra.mxu0 %v308
    %866 = vmatprep.subr.mxu0 0.0
    %867 = vmatpush1.msra.mxu0 %v309
    %868 = vmatprep.subr.mxu0 0.0
    %869 = vmatpush1.msra.mxu0 %v310
    %870 = vmatprep.subr.mxu0 0.0
    %871 = vmatpush1.msra.mxu0 %v311
    %872 = vmatprep.subr.mxu0 0.0
    %873 = vmatpush1.msra.mxu0 %v312
    %874 = vmatprep.mubr.f32.mxu0 %v56
    %875 = vmatmul.mubr.f32.gmra.mrb[0].mxu0 %v55
    %v876 = vpop.f32.mrb[0].mxu0
    %v877 = vadd.f32 %v807, %v876
    %v878 = vpop.f32.mrb[0].mxu0
    %879 = vdwg.mxu0
    %880 = vst [vmem:[#allocation7] sm:$0x1f] %v877
    // Predicated region
    $region22: #{tpu_custom_call.1} parent=1 // pred_check
      _
    $region23: #{tpu_custom_call.1} parent=1 // pred_check_branch
      %882 = sbr.rel (0) target = $region25
    $region24: #{tpu_custom_call.1} parent=1 // pred_region
      %s884 = ssub.s32 128, 128
      %885 = vsyncadd [#allocation4], %s884
      %s887 = sshll.u32 [#allocation7], 4
      %s888 = int_to_ptr.vmem [resolvable:$true] %s887
      %890 = dma.vmem_to_hbm [thread:$0]  %s888, 128, %s3, [#allocation4]
    $region25: #{tpu_custom_call.1} parent=1 // pred_fallthru
      _
    // Predicated region
    $region26: #{tpu_custom_call.1} parent=1 // pred_check
      _
    $region27: #{tpu_custom_call.1} parent=1 // pred_check_branch
      %892 = sbr.rel (0) target = $region29
    $region28: #{tpu_custom_call.1} parent=1 // pred_region
      %893 = dma.done [#allocation4], 128
    $region29: #{tpu_custom_call.1} parent=1 // pred_fallthru
      _
    %894 = vsyncpa [#allocation3], 1
    %895 = vsyncpa [#allocation6], 1
    %896 = vsyncpa [#allocation4], 1

</llo_original>
